<compile_context>
chip_gen: v5e
topology: v5e:2x2
jax: 0.10.0
libtpu: 0.0.40
codegen_flags: <defaults>
</compile_context>

<pallas_src>
import functools

import jax
import jax.numpy as jnp
from jax.experimental import pallas as pl
from jax.experimental.pallas import tpu as pltpu

_LANES = 512                   # lane-dense last dim for flattened views
_TARGET_TILE_BYTES = 2 << 20   # ~2 MiB per-operand tile; x + rand + out, each
                               # double-buffered, stays well inside the default
                               # scoped VMEM on v5e / v6e / v7x.


# ---------------------------------------------------------------------------
# Kernels (mask math in f32, cast to the output dtype at the store)
# ---------------------------------------------------------------------------
def _dropout2d_kernel(x_ref, gate_ref, o_ref, *, threshold, scale):
    # One Bernoulli decision per row (= per (n, c) feature map), lane-broadcast.
    keep = gate_ref[...] >= jnp.uint32(threshold)              # (TR, 1) bool
    mask = jnp.where(keep, jnp.float32(scale), jnp.float32(0.0))
    o_ref[...] = (x_ref[...] * mask).astype(o_ref.dtype)


def _dropout_elem_kernel(x_ref, bits_ref, o_ref, *, threshold, scale):
    # Element-wise Bernoulli dropout (F.dropout, training=True).
    # Integer-threshold compare + single select: no bits->float conversion.
    keep = bits_ref[...] >= jnp.uint32(threshold)               # (TR, W) bool
    mask = jnp.where(keep, jnp.float32(scale), jnp.float32(0.0))
    o_ref[...] = (x_ref[...] * mask).astype(o_ref.dtype)


def _gaussian_kernel(x_ref, z_ref, o_ref, *, sig_over_mu, inv_mu):
    # (1/mu) * clamp(mu + sigma*z, 0, 1)  ==  clamp(1 + (sigma/mu)*z, 0, 1/mu)
    m = jnp.clip(jnp.float32(1.0) + jnp.float32(sig_over_mu) * z_ref[...],
                 jnp.float32(0.0), jnp.float32(inv_mu))
    o_ref[...] = (x_ref[...] * m).astype(o_ref.dtype)


# ---------------------------------------------------------------------------
# Tiling helpers
# ---------------------------------------------------------------------------
def _row_tiling(nrows, row_bytes):
    """Pick (padded_rows, tile_rows): tile_rows divides padded_rows and the
    (tile_rows, W) block is Mosaic-legal (multiple of 8 sublanes, or a single
    full-extent tile)."""
    tile_rows = max(1, _TARGET_TILE_BYTES // max(int(row_bytes), 1))
    if tile_rows >= nrows:
        return nrows, nrows                   # single full-extent tile (always legal)
    tile_rows = max(8, (tile_rows // 8) * 8)  # sublane-aligned tiles
    padded_rows = -(-nrows // tile_rows) * tile_rows
    return padded_rows, tile_rows


def _pad_rows(a2d, padded_rows):
    r = a2d.shape[0]
    if padded_rows == r:
        return a2d
    pad = jnp.zeros((padded_rows - r, a2d.shape[1]), a2d.dtype)
    return jnp.concatenate([a2d, pad], axis=0)


def _call_rowtiled(kernel, x2d, rand2d, tile_rows):
    """Row-tiled, software-pipelined elementwise launch: x, the random operand
    and the output all stream through VMEM in (tile_rows, W) blocks."""
    rows, w = x2d.shape
    rw = rand2d.shape[1]
    return pl.pallas_call(
        kernel,
        out_shape=jax.ShapeDtypeStruct((rows, w), x2d.dtype),
        grid=(rows // tile_rows,),
        in_specs=[
            pl.BlockSpec((tile_rows, w), lambda i: (i, 0)),
            pl.BlockSpec((tile_rows, rw), lambda i: (i, 0)),
        ],
        out_specs=pl.BlockSpec((tile_rows, w), lambda i: (i, 0)),
        compiler_params=pltpu.CompilerParams(
            dimension_semantics=("parallel",)),   # megacore split on v7x
    )(x2d, rand2d)


def _lane_dense_view(x):
    """Flatten x to a lane-dense (rows, _LANES) zero-padded view."""
    total = x.size
    lanes = _LANES
    rows = -(-total // lanes)
    row_bytes = lanes * max(x.dtype.itemsize, 4)   # random operand is 4 B/elem
    padded_rows, tile_rows = _row_tiling(rows, row_bytes)
    padded_total = padded_rows * lanes
    flat = x.reshape(-1)
    if padded_total != total:
        flat = jnp.concatenate(
            [flat, jnp.zeros((padded_total - total,), x.dtype)])
    return flat.reshape(padded_rows, lanes), total, tile_rows


def _bernoulli_threshold(p):
    # drop iff bits < threshold, so P(drop) = threshold / 2**32 = p.
    return min(int(round(float(p) * 4294967296.0)), 4294967295)


# ---------------------------------------------------------------------------
# Public forward (matches the PyTorch Dropout module semantics)
# ---------------------------------------------------------------------------
def dropout_forward(x, *, p=0.5, mu=0.5, sigma=0.3, dist="bernoulli",
                    linear=False, training=True, key=None, seed=0):
    assert dist in ("bernoulli", "gaussian", "none")
    p, mu, sigma = float(p), float(mu), float(sigma)
    assert 0.0 <= p <= 1.0
    assert sigma > 0.0

    if (not training) or dist == "none":
        return x
    if key is None:
        key = jax.random.PRNGKey(seed)

    if dist == "bernoulli":
        if p == 0.0:
            return x
        if p >= 1.0:
            return jnp.zeros_like(x)   # avoid 0 * inf -> NaN; PyTorch gives zeros
        threshold = _bernoulli_threshold(p)
        scale = 1.0 / (1.0 - p)

        if not linear:
            # F.dropout2d: one decision per (n, c) channel map. Tile only the
            # N*C row axis; keep the full H*W lane extent (always legal).
            assert x.ndim == 4, "channel dropout expects NCHW input"
            n, c, h, w = x.shape
            rows = n * c
            x2d = x.reshape(rows, h * w)
            padded_rows, tile_rows = _row_tiling(
                rows, h * w * max(x.dtype.itemsize, 4))
            x2d = _pad_rows(x2d, padded_rows)
            gate = jax.random.bits(key, (padded_rows, 1), dtype=jnp.uint32)
            out2d = _call_rowtiled(
                functools.partial(_dropout2d_kernel,
                                  threshold=threshold, scale=scale),
                x2d, gate, tile_rows)
            return out2d[:rows].reshape(n, c, h, w)

        # F.dropout: element-wise mask on a lane-dense flattened view.
        x2d, total, tile_rows = _lane_dense_view(x)
        bits = jax.random.bits(key, x2d.shape, dtype=jnp.uint32)
        out2d = _call_rowtiled(
            functools.partial(_dropout_elem_kernel,
                              threshold=threshold, scale=scale),
            x2d, bits, tile_rows)
        return out2d.reshape(-1)[:total].reshape(x.shape)

    # gaussian soft-mask dropout
    x2d, total, tile_rows = _lane_dense_view(x)
    z = jax.random.normal(key, x2d.shape, dtype=jnp.float32)
    out2d = _call_rowtiled(
        functools.partial(_gaussian_kernel,
                          sig_over_mu=sigma / mu, inv_mu=1.0 / mu),
        x2d, z, tile_rows)
    return out2d.reshape(-1)[:total].reshape(x.shape)


if __name__ == "__main__":
    root = jax.random.PRNGKey(0)
    kx, k1, k2, k3 = jax.random.split(root, 4)
    x = jax.random.normal(kx, (2, 4, 16, 16), dtype=jnp.float32)

    # Default config: bernoulli channel dropout (F.dropout2d), training mode.
    y_2d = dropout_forward(x, p=0.5, dist="bernoulli", linear=False,
                           training=True, key=k1)
    # Element-wise bernoulli dropout (F.dropout), training mode.
    y_lin = dropout_forward(x, p=0.5, dist="bernoulli", linear=True,
                            training=True, key=k2)
    # Gaussian soft-mask dropout, training mode.
    y_gauss = dropout_forward(x, mu=0.5, sigma=0.3, dist="gaussian",
                              training=True, key=k3)
    # Eval mode: identity.
    y_eval = dropout_forward(x, p=0.5, dist="bernoulli", training=False)
    # p == 1: all dropped, must be zeros (not NaN).
    y_p1 = dropout_forward(x, p=1.0, dist="bernoulli", linear=True,
                           training=True, key=k2)

    jax.block_until_ready((y_2d, y_lin, y_gauss, y_eval, y_p1))

    # Light sanity checks on semantics.
    assert y_2d.shape == x.shape and y_2d.dtype == x.dtype
    # dropout2d: each (n, c) map is either all-zero or exactly x * 1/(1-p).
    per_chan = y_2d.reshape(8, -1)
    xc = x.reshape(8, -1)
    for r in range(8):
        row = per_chan[r]
        ok_zero = bool(jnp.all(row == 0.0))
        ok_scaled = bool(jnp.allclose(row, 2.0 * xc[r], rtol=1e-6, atol=1e-6))
        assert ok_zero or ok_scaled
    # linear dropout: every element is either 0 or exactly 2*x.
    assert bool(jnp.all((y_lin == 0.0) | (jnp.abs(y_lin - 2.0 * x) <= 1e-6)))
    # gaussian: |out| <= (1/mu) * |x| since the soft mask is in [0, 1].
    assert bool(jnp.all(jnp.abs(y_gauss) <= 2.0 * jnp.abs(x) + 1e-6))
    # p = 1 bernoulli -> all zeros, no NaN.
    assert bool(jnp.all(y_p1 == 0.0))
    # eval mode is identity.
    assert bool(jnp.array_equal(y_eval, x))

    print("KERNEL_OK")
</pallas_src>

<mosaic_0001>
module attributes {stable_mosaic.version = 11 : i64} {
  func.func @_dropout2d_kernel(%arg0: i32, %arg1: memref<8x256xf32, #tpu.memory_space<vmem>>, %arg2: memref<8x1xi32, #tpu.memory_space<vmem>>, %arg3: memref<8x256xf32, #tpu.memory_space<vmem>>) attributes {dimension_semantics = [#tpu.dimension_semantics<parallel>], iteration_bounds = array<i64: 1>, scalar_prefetch = 0 : i64, scratch_operands = 0 : i64, tpu.core_type = #tpu.core_type<tc>, window_params = [{transform_indices = @transform_0, window_bounds = array<i64: 8, 256>}, {transform_indices = @transform_1, window_bounds = array<i64: 8, 1>}, {transform_indices = @transform_2, window_bounds = array<i64: 8, 256>}]} {
    %c0 = arith.constant 0 : index
    %c0_0 = arith.constant 0 : index
    %0 = vector.load %arg2[%c0, %c0_0] : memref<8x1xi32, #tpu.memory_space<vmem>>, vector<8x1xi32>
    %c-2147483648_i32 = arith.constant -2147483648 : i32
    %1 = vector.broadcast %c-2147483648_i32 : i32 to vector<8x1xi32>
    %2 = arith.cmpi uge, %0, %1 : vector<8x1xi32>
    %cst = arith.constant 2.000000e+00 : f32
    %cst_1 = arith.constant 0.000000e+00 : f32
    %3 = vector.broadcast %cst : f32 to vector<8x1xf32>
    %4 = vector.broadcast %cst_1 : f32 to vector<8x1xf32>
    %5 = arith.select %2, %3, %4 : vector<8x1xi1>, vector<8x1xf32>
    %c0_2 = arith.constant 0 : index
    %c0_3 = arith.constant 0 : index
    %6 = vector.load %arg1[%c0_2, %c0_3] : memref<8x256xf32, #tpu.memory_space<vmem>>, vector<8x256xf32>
    %7 = vector.broadcast %5 : vector<8x1xf32> to vector<8x256xf32>
    %8 = arith.mulf %6, %7 : vector<8x256xf32>
    %c0_4 = arith.constant 0 : index
    %c0_5 = arith.constant 0 : index
    %9 = vector.load %arg3[%c0_4, %c0_5] : memref<8x256xf32, #tpu.memory_space<vmem>>, vector<8x256xf32>
    tpu.vector_store %arg3[%c0_4, %c0_5], %8 {strides = array<i32>} : memref<8x256xf32, #tpu.memory_space<vmem>>, vector<8x256xf32>,
    return
  }
  func.func @transform_0(%arg0: i32) -> (i32, i32) {
    %c0_i32 = arith.constant 0 : i32
    %c0_i32_0 = arith.constant 0 : i32
    return %arg0, %c0_i32 : i32, i32
  }
  func.func @transform_1(%arg0: i32) -> (i32, i32) {
    %c0_i32 = arith.constant 0 : i32
    %c0_i32_0 = arith.constant 0 : i32
    return %arg0, %c0_i32 : i32, i32
  }
  func.func @transform_2(%arg0: i32) -> (i32, i32) {
    %c0_i32 = arith.constant 0 : i32
    %c0_i32_0 = arith.constant 0 : i32
    return %arg0, %c0_i32 : i32, i32
  }
}

</mosaic_0001>

<llo_original>
// kernel: tpu_custom_call.1
$region0: #{tpu_custom_call.1}
  #allocation0 [shape = 'u32[]', space=smem, size = 0x4, offset = 0x4, fixed_abs, tag = 'smem constant byte address 0x4 - core index']
  #allocation1 [shape = 'u32[72,128]{1,0:T(1,128)}', space=vmem, size = 0x9000, scoped, tag = 'internal scratch']
  %s0 = inlined_call_operand.hbm [shape: f32[8,256], index: 0, kind: input, shape index: {}]
  %s1 = inlined_call_operand.vmem [shape: u32[8,1], index: 1, kind: input, shape index: {}]
  %s2 = inlined_call_operand.hbm [shape: f32[8,256], index: 2, kind: output, shape index: {}]
  %s3 = sld [smem:[#allocation0]]
  $region22: #{tpu_custom_call.1} parent=0
    _
  %s5 = ssub.s32 1, %s3
  %s6 = scalar_select 0, %s5, %s3
  $region1: #{tpu_custom_call.1} parent=0
    #allocation2 [shape = 'u8[8192]{0}', space=vmem, size = 0x2000, scoped, tag = 'input window, operand 0, single buffered']
    #allocation3 [shape = 's32[1]{0}', space=sflag, size = 0x4, scoped, tag = 'scoped memory for tpu_custom_call.1']
    #allocation4 [shape = 's32[1]{0}', space=sflag, size = 0x4, scoped, tag = 'scoped memory for tpu_custom_call.1']
    #allocation5 [shape = 'u8[8192]{0}', space=vmem, size = 0x2000, scoped, tag = 'output window, operand 0, single buffered']
    %7 = vsyncpa [#allocation3], 0
    %8 = vsyncpa [#allocation4], 0
    // Predicated region
    $region2: #{tpu_custom_call.1} parent=1 // pred_check
      _
    $region3: #{tpu_custom_call.1} parent=1 // pred_check_branch
      %10 = sbr.rel (0) target = $region5
    $region4: #{tpu_custom_call.1} parent=1 // pred_region
      %12 = vsyncadd [#allocation3], 0
      %s14 = sshll.u32 %s0, 4
      %s15 = int_to_ptr.hbm [resolvable:$true] %s14
      %s16 = sshll.u32 [#allocation2], 4
      %s17 = int_to_ptr.vmem [resolvable:$true] %s16
      %19 = dma.hbm_to_vmem [thread:$0]  %s15, 256, %s17, [#allocation3]
    $region5: #{tpu_custom_call.1} parent=1 // pred_fallthru
      _
    // Predicated region
    $region6: #{tpu_custom_call.1} parent=1 // pred_check
      _
    $region7: #{tpu_custom_call.1} parent=1 // pred_check_branch
      %21 = sbr.rel (0) target = $region9
    $region8: #{tpu_custom_call.1} parent=1 // pred_region
      _
    $region9: #{tpu_custom_call.1} parent=1 // pred_fallthru
      _
    // Predicated region
    $region10: #{tpu_custom_call.1} parent=1 // pred_check
      _
    $region11: #{tpu_custom_call.1} parent=1 // pred_check_branch
      %23 = sbr.rel (0) target = $region13
    $region12: #{tpu_custom_call.1} parent=1 // pred_region
      %25 = dma.done [#allocation3], 256
    $region13: #{tpu_custom_call.1} parent=1 // pred_fallthru
      _
    %v26 = vld [vmem:[%s1] sm:$0xff]
    %v27 = vadd.s32 %v26, 2147483648
    %vm29 = vcmp.ge.s32.totalorder %v27, 0
    %v30 = vsel %vm29, 2.0, 0.0
    %v31 = vld [vmem:[#allocation2] sm:$0xff]
    %v32 = vld [vmem:[#allocation2 + $0x8] sm:$0xff]
    %34 = vset.pattern.permute.xlu0 0
    %35 = vperm.xlu0 %34, %v30
    %v36 = vpop.permute.xlu0 %35
    %v38 = vmul.f32 %v31, %v36
    %v39 = vmul.f32 %v32, %v36
    %40 = vst [vmem:[#allocation5] sm:$0xff] %v38
    %41 = vst [vmem:[#allocation5 + $0x8] sm:$0xff] %v39
    // Predicated region
    $region14: #{tpu_custom_call.1} parent=1 // pred_check
      _
    $region15: #{tpu_custom_call.1} parent=1 // pred_check_branch
      %43 = sbr.rel (0) target = $region17
    $region16: #{tpu_custom_call.1} parent=1 // pred_region
      %45 = vsyncadd [#allocation4], 0
      %s47 = sshll.u32 [#allocation5], 4
      %s48 = int_to_ptr.vmem [resolvable:$true] %s47
      %s49 = sshll.u32 %s2, 4
      %s50 = int_to_ptr.hbm [resolvable:$true] %s49
      %52 = dma.vmem_to_hbm [thread:$0]  %s48, 256, %s50, [#allocation4]
    $region17: #{tpu_custom_call.1} parent=1 // pred_fallthru
      _
    // Predicated region
    $region18: #{tpu_custom_call.1} parent=1 // pred_check
      _
    $region19: #{tpu_custom_call.1} parent=1 // pred_check_branch
      %54 = sbr.rel (0) target = $region21
    $region20: #{tpu_custom_call.1} parent=1 // pred_region
      %56 = dma.done [#allocation4], 256
    $region21: #{tpu_custom_call.1} parent=1 // pred_fallthru
      _
    %57 = vsyncpa [#allocation3], 1
    %58 = vsyncpa [#allocation4], 1

</llo_original>
